<compile_context>
chip_gen: v7x
topology: tpu7x:2x2x1
jax: 0.10.0
libtpu: 0.0.40
codegen_flags: <defaults>
</compile_context>

<pallas_src>
import numpy as np
import jax
import jax.numpy as jnp
from jax.experimental import pallas as pl
from jax.experimental.pallas import tpu as pltpu


# ----------------------------- Pallas kernel ------------------------------ #
def decode_var_net_kernel(z_ref, mu_ref, w1_ref, b1_ref, w2_ref, b2_ref,
                          out_ref):
    # In-kernel concat along the lane axis: stays in-vreg (no XLA concat,
    # no HBM round trip), then ONE merged K=(dim_z+dim_mu) dot.
    zm = jnp.concatenate([z_ref[...], mu_ref[...]], axis=-1)        # (TM, 32) f32
    zm = zm.astype(w1_ref.dtype)                                    # bf16 MXU operand
    h = (jnp.dot(zm, w1_ref[...], preferred_element_type=jnp.float32)
         + b1_ref[...])                                             # f32 accum + bias
    h = jnp.maximum(h, 0.0)                                         # ReLU in f32 (VPU)
    x = (jnp.dot(h.astype(w2_ref.dtype), w2_ref[...],
                 preferred_element_type=jnp.float32)
         + b2_ref[...])                                             # f32 accum + bias
    out_ref[...] = jnp.exp(x)                                       # exp in f32 (EUP)


# ------------------------------- Wrapper ----------------------------------- #
def decode_var_net(mu, z, params, *, block_rows=128):
    """mu: (B, dim_mu), z: (B, dim_z). Returns exp(net(concat([z, mu], -1)))."""
    w1, b1, w2, b2 = params
    B, dim_z = z.shape
    dim_mu = mu.shape[1]
    dim_in, hidden = w1.shape
    dim_x = w2.shape[1]
    assert dim_in == dim_z + dim_mu

    # Row-tile grid; fall back to a single full-batch block if B does not tile.
    tm = block_rows if (B % block_rows == 0 and B >= block_rows) else B
    grid = (B // tm,)

    def resident(shape):  # weights/bias: same block every grid step -> VMEM-resident
        return pl.BlockSpec(shape, lambda i: (0, 0))

    flops = 2 * B * (dim_in * hidden + hidden * dim_x)
    bytes_accessed = (4 * (z.size + mu.size + b1.size + b2.size + B * dim_x)
                      + w1.dtype.itemsize * w1.size
                      + w2.dtype.itemsize * w2.size)

    return pl.pallas_call(
        decode_var_net_kernel,
        out_shape=jax.ShapeDtypeStruct((B, dim_x), jnp.float32),
        grid=grid,
        in_specs=[
            pl.BlockSpec((tm, dim_z), lambda i: (i, 0)),
            pl.BlockSpec((tm, dim_mu), lambda i: (i, 0)),
            resident((dim_in, hidden)),
            resident((1, hidden)),
            resident((hidden, dim_x)),
            resident((1, dim_x)),
        ],
        out_specs=pl.BlockSpec((tm, dim_x), lambda i: (i, 0)),
        compiler_params=pltpu.CompilerParams(
            dimension_semantics=("parallel",)),
        cost_estimate=pl.CostEstimate(
            flops=flops,
            transcendentals=B * dim_x,
            bytes_accessed=bytes_accessed),
    )(z, mu, w1, b1, w2, b2)


# --------------------------- Parameter init ------------------------------- #
def init_params(key, dim_z, dim_mu, hidden, dim_x, weights_dtype=jnp.bfloat16):
    """Deterministic init mimicking torch.nn.Linear (uniform +-1/sqrt(fan_in)).

    Weights are stored (in_features, out_features).  Matmul weights are cast
    to `weights_dtype` (bf16) once at init; biases are kept f32 and reshaped
    to (1, N).  All per-call cast/reshape/concat work is hoisted here.
    """
    dim_in = dim_z + dim_mu
    k1, k2, k3, k4 = jax.random.split(key, 4)
    bnd1 = 1.0 / np.sqrt(dim_in)
    bnd2 = 1.0 / np.sqrt(hidden)
    w1 = jax.random.uniform(k1, (dim_in, hidden), jnp.float32, -bnd1, bnd1)
    b1 = jax.random.uniform(k2, (hidden,), jnp.float32, -bnd1, bnd1)
    w2 = jax.random.uniform(k3, (hidden, dim_x), jnp.float32, -bnd2, bnd2)
    b2 = jax.random.uniform(k4, (dim_x,), jnp.float32, -bnd2, bnd2)

    kernel_params = (w1.astype(weights_dtype), b1.reshape(1, hidden),
                     w2.astype(weights_dtype), b2.reshape(1, dim_x))
    full_params = (w1, b1, w2, b2)     # f32 masters for the pure-JAX reference
    return kernel_params, full_params


# ------------------------------ References --------------------------------- #
def reference_f32(mu, z, w1, b1, w2, b2):
    """Pure f32 reference (matches the PyTorch module's math exactly)."""
    zm = jnp.concatenate([z, mu], axis=-1)
    h = jnp.maximum(zm @ w1 + b1, 0.0)
    return jnp.exp(h @ w2 + b2)


def reference_bf16(mu, z, w1, b1, w2, b2, weights_dtype=jnp.bfloat16):
    """Reference using the same bf16 operands / f32 accumulation as the kernel."""
    zm = jnp.concatenate([z, mu], axis=-1).astype(weights_dtype)
    h = jnp.maximum(
        jnp.dot(zm, w1.astype(weights_dtype),
                preferred_element_type=jnp.float32) + b1, 0.0)
    x = jnp.dot(h.astype(weights_dtype), w2.astype(weights_dtype),
                preferred_element_type=jnp.float32) + b2
    return jnp.exp(x)


if __name__ == "__main__":
    # Config: dim_mu=16, dim_z=16, shape_x=(4, 8, 8) -> dim_x=256, hidden=256
    # Larger effective batch per call (perf review): B=256 -> grid=(2,) of 128-row tiles.
    B = 256
    dim_mu, dim_z = 16, 16
    shape_x = (4, 8, 8)
    dim_x = int(np.prod(shape_x))
    hidden = 256

    key = jax.random.PRNGKey(0)
    kmu, kz, kp = jax.random.split(key, 3)
    mu = jax.random.normal(kmu, (B, dim_mu), jnp.float32)
    z = jax.random.normal(kz, (B, dim_z), jnp.float32)
    params, full_params = init_params(kp, dim_z, dim_mu, hidden, dim_x)

    out = decode_var_net(mu, z, params, block_rows=128)
    out = jax.block_until_ready(out)
    assert out.shape == (B, dim_x)

    # Strict check against a reference using identical bf16 operands / f32 accum.
    ref_bf16 = reference_bf16(mu, z, *full_params)
    np.testing.assert_allclose(np.asarray(out), np.asarray(ref_bf16),
                               rtol=2e-3, atol=2e-3)
    # Loose semantic check against the exact f32 math of the PyTorch module.
    ref_f32 = reference_f32(mu, z, *full_params)
    np.testing.assert_allclose(np.asarray(out), np.asarray(ref_f32),
                               rtol=1e-1, atol=1e-1)
    print("KERNEL_OK")
</pallas_src>

<mosaic_0001>
module attributes {stable_mosaic.version = 11 : i64} {
  func.func @decode_var_net_kernel(%arg0: i32, %arg1: memref<128x16xf32, #tpu.memory_space<vmem>>, %arg2: memref<128x16xf32, #tpu.memory_space<vmem>>, %arg3: memref<32x256xbf16, #tpu.memory_space<vmem>>, %arg4: memref<1x256xf32, #tpu.memory_space<vmem>>, %arg5: memref<256x256xbf16, #tpu.memory_space<vmem>>, %arg6: memref<1x256xf32, #tpu.memory_space<vmem>>, %arg7: memref<128x256xf32, #tpu.memory_space<vmem>>) attributes {dimension_semantics = [#tpu.dimension_semantics<parallel>], iteration_bounds = array<i64: 2>, scalar_prefetch = 0 : i64, scratch_operands = 0 : i64, tpu.core_type = #tpu.core_type<tc>, window_params = [{transform_indices = @transform_0, window_bounds = array<i64: 128, 16>}, {transform_indices = @transform_1, window_bounds = array<i64: 128, 16>}, {pipeline_mode = #tpu.pipeline_mode<synchronous>, transform_indices = @transform_2, window_bounds = array<i64: 32, 256>}, {pipeline_mode = #tpu.pipeline_mode<synchronous>, transform_indices = @transform_3, window_bounds = array<i64: 1, 256>}, {pipeline_mode = #tpu.pipeline_mode<synchronous>, transform_indices = @transform_4, window_bounds = array<i64: 256, 256>}, {pipeline_mode = #tpu.pipeline_mode<synchronous>, transform_indices = @transform_5, window_bounds = array<i64: 1, 256>}, {transform_indices = @transform_6, window_bounds = array<i64: 128, 256>}]} {
    %c0 = arith.constant 0 : index
    %c0_0 = arith.constant 0 : index
    %0 = vector.load %arg1[%c0, %c0_0] : memref<128x16xf32, #tpu.memory_space<vmem>>, vector<128x16xf32>
    %c0_1 = arith.constant 0 : index
    %c0_2 = arith.constant 0 : index
    %1 = vector.load %arg2[%c0_1, %c0_2] : memref<128x16xf32, #tpu.memory_space<vmem>>, vector<128x16xf32>
    %2 = tpu.concatenate %0, %1 in 1 : vector<128x16xf32>, vector<128x16xf32> -> vector<128x32xf32>
    %3 = arith.truncf %2 : vector<128x32xf32> to vector<128x32xbf16>
    %c0_3 = arith.constant 0 : index
    %c0_4 = arith.constant 0 : index
    %4 = vector.load %arg3[%c0_3, %c0_4] : memref<32x256xbf16, #tpu.memory_space<vmem>>, vector<32x256xbf16>
    %cst = arith.constant dense<0.000000e+00> : vector<128x256xf32>
    %5 = tpu.matmul %3, %4, %cst {dimension_numbers = #tpu.dot_dimension_numbers<[1], [0], [0], [1], [0, 0, 1, 1], [], []>} : vector<128x32xbf16>, vector<32x256xbf16>, vector<128x256xf32> -> vector<128x256xf32>
    %c0_5 = arith.constant 0 : index
    %c0_6 = arith.constant 0 : index
    %6 = vector.load %arg4[%c0_5, %c0_6] : memref<1x256xf32, #tpu.memory_space<vmem>>, vector<1x256xf32>
    %7 = vector.broadcast %6 : vector<1x256xf32> to vector<128x256xf32>
    %8 = arith.addf %5, %7 : vector<128x256xf32>
    %cst_7 = arith.constant 0.000000e+00 : f32
    %9 = vector.broadcast %cst_7 : f32 to vector<128x256xf32>
    %10 = arith.maximumf %8, %9 : vector<128x256xf32>
    %11 = arith.truncf %10 : vector<128x256xf32> to vector<128x256xbf16>
    %c0_8 = arith.constant 0 : index
    %c0_9 = arith.constant 0 : index
    %12 = vector.load %arg5[%c0_8, %c0_9] : memref<256x256xbf16, #tpu.memory_space<vmem>>, vector<256x256xbf16>
    %cst_10 = arith.constant dense<0.000000e+00> : vector<128x256xf32>
    %13 = tpu.matmul %11, %12, %cst_10 {dimension_numbers = #tpu.dot_dimension_numbers<[1], [0], [0], [1], [0, 0, 1, 1], [], []>} : vector<128x256xbf16>, vector<256x256xbf16>, vector<128x256xf32> -> vector<128x256xf32>
    %c0_11 = arith.constant 0 : index
    %c0_12 = arith.constant 0 : index
    %14 = vector.load %arg6[%c0_11, %c0_12] : memref<1x256xf32, #tpu.memory_space<vmem>>, vector<1x256xf32>
    %15 = vector.broadcast %14 : vector<1x256xf32> to vector<128x256xf32>
    %16 = arith.addf %13, %15 : vector<128x256xf32>
    %17 = math.exp %16 : vector<128x256xf32>
    %c0_13 = arith.constant 0 : index
    %c0_14 = arith.constant 0 : index
    %18 = vector.load %arg7[%c0_13, %c0_14] : memref<128x256xf32, #tpu.memory_space<vmem>>, vector<128x256xf32>
    tpu.vector_store %arg7[%c0_13, %c0_14], %17 {strides = array<i32>} : memref<128x256xf32, #tpu.memory_space<vmem>>, vector<128x256xf32>,
    return
  }
  func.func @transform_0(%arg0: i32) -> (i32, i32) {
    %c0_i32 = arith.constant 0 : i32
    %c0_i32_0 = arith.constant 0 : i32
    return %arg0, %c0_i32 : i32, i32
  }
  func.func @transform_1(%arg0: i32) -> (i32, i32) {
    %c0_i32 = arith.constant 0 : i32
    %c0_i32_0 = arith.constant 0 : i32
    return %arg0, %c0_i32 : i32, i32
  }
  func.func @transform_2(%arg0: i32) -> (i32, i32) {
    %c0_i32 = arith.constant 0 : i32
    %c0_i32_0 = arith.constant 0 : i32
    %c0_i32_1 = arith.constant 0 : i32
    return %c0_i32, %c0_i32_0 : i32, i32
  }
  func.func @transform_3(%arg0: i32) -> (i32, i32) {
    %c0_i32 = arith.constant 0 : i32
    %c0_i32_0 = arith.constant 0 : i32
    %c0_i32_1 = arith.constant 0 : i32
    return %c0_i32, %c0_i32_0 : i32, i32
  }
  func.func @transform_4(%arg0: i32) -> (i32, i32) {
    %c0_i32 = arith.constant 0 : i32
    %c0_i32_0 = arith.constant 0 : i32
    %c0_i32_1 = arith.constant 0 : i32
    return %c0_i32, %c0_i32_0 : i32, i32
  }
  func.func @transform_5(%arg0: i32) -> (i32, i32) {
    %c0_i32 = arith.constant 0 : i32
    %c0_i32_0 = arith.constant 0 : i32
    %c0_i32_1 = arith.constant 0 : i32
    return %c0_i32, %c0_i32_0 : i32, i32
  }
  func.func @transform_6(%arg0: i32) -> (i32, i32) {
    %c0_i32 = arith.constant 0 : i32
    %c0_i32_0 = arith.constant 0 : i32
    return %arg0, %c0_i32 : i32, i32
  }
}

</mosaic_0001>

<llo_original>
// kernel: tpu_custom_call.1
$region0: #{tpu_custom_call.1}
  #allocation0 [shape = 'u32[]', space=smem, size = 0x4, offset = 0x4, fixed_abs, tag = 'smem constant byte address 0x4 - core index']
  #allocation1 [shape = 'u32[144,128]{1,0:T(1,128)}', space=vmem, size = 0x12000, scoped, tag = 'internal scratch']
  %s0 = inlined_call_operand.vmem [shape: f32[256,16], index: 0, kind: input, shape index: {}]
  %s1 = inlined_call_operand.vmem [shape: f32[256,16], index: 1, kind: input, shape index: {}]
  %s2 = inlined_call_operand.vmem [shape: bf16[32,256], index: 2, kind: input, shape index: {}]
  %s3 = inlined_call_operand.vmem [shape: f32[1,256], index: 3, kind: input, shape index: {}]
  %s4 = inlined_call_operand.vmem [shape: bf16[256,256], index: 4, kind: input, shape index: {}]
  %s5 = inlined_call_operand.vmem [shape: f32[1,256], index: 5, kind: input, shape index: {}]
  %s6 = inlined_call_operand.hbm [shape: f32[256,256], index: 6, kind: output, shape index: {}]
  %s7 = sld [smem:[#allocation0]]
  $region57: #{tpu_custom_call.1} parent=0
    _
  %s9 = ssub.s32 1, %s7
  %s10 = scalar_select 0, %s9, %s7
  $region1: #{tpu_custom_call.1} parent=0
    #allocation2 [shape = 'u8[262144]{0}', space=vmem, size = 0x40000, scoped, tag = 'output window, operand 0']
    #allocation3 [shape = 's32[2]{0}', space=sflag, size = 0x8, scoped, tag = 'scoped memory for tpu_custom_call.1']
    %11 = vsyncpa [#allocation3], 0
    %s12 = scalar_lea.sflag [#allocation3], 1
    %13 = vsyncpa %s12, 0
    loop: start=0, step=1, limit=4
    $region2: #{tpu_custom_call.1} parent=1 // loop_pre_header
      _
    $region3: #{tpu_custom_call.1} parent=1 // loop_header
      %s15 = sphi 0, %s19
      %p16 = scmp.ge.s32.totalorder %s15, 4
      %s25 = sphi 0, %s27
      %s28 = sphi 0, %s25
      %s29 = sphi 0, %s28
      %s45 = sphi 0, %s29
      %s51 = sphi 0, %s53
      %s54 = sphi 0, %s51
      %s55 = sphi 0, %s54
      %s71 = sphi 0, %s55
      %s75 = sphi 0, %s75
      %s77 = sphi 0, %s75
      %s78 = sphi 0, %s77
      %s92 = sphi 0, %s78
      %s96 = sphi 0, %s96
      %s98 = sphi 0, %s96
      %s99 = sphi 0, %s98
      %s113 = sphi 0, %s99
      %s117 = sphi 0, %s117
      %s119 = sphi 0, %s117
      %s120 = sphi 0, %s119
      %s134 = sphi 0, %s120
      %s138 = sphi 0, %s138
      %s140 = sphi 0, %s138
      %s141 = sphi 0, %s140
      %s155 = sphi 0, %s141
      %s161 = sphi 0, %s163
      %s164 = sphi 0, %s161
      %s165 = sphi 0, %s164
      %s181 = sphi 0, %s165
    $region4: #{tpu_custom_call.1} parent=1 // loop_header_branch
      %18 = sbr.rel (%p16) target = $region8
    $region5: #{tpu_custom_call.1} parent=1 // loop_body
      %s20 = ssub.s32 %s15, 1
      %s21 = ssub.s32 %s15, 2
      %s22 = sadd.s32 %s15, 1
      %s23 = ssub.s32 %s15, %s22
      %p24 = scmp.eq.s32.totalorder %s23, 0
      %s26 = sadd.s32 %s25, 1
      %s27 = scalar_select %p24, %s25, %s26
      %p30 = pneg %p24
      %p31 = scmp.eq.s32.totalorder %s15, 1
      %p32 = por %p30, %p31
      %p33 = scmp.ne.s32.totalorder %s25, %s28
      %p34 = scmp.eq.s32.totalorder %s15, 0
      %p35 = por %p33, %p34
      %p36 = scmp.ne.s32.totalorder %s25, %s28
      %p37 = scmp.eq.s32.totalorder %s20, 1
      %p38 = por %p36, %p37
      %p39 = scmp.ne.s32.totalorder %s28, %s29
      %p40 = scmp.eq.s32.totalorder %s20, 0
      %p41 = por %p39, %p40
      %p42 = scmp.ne.s32.totalorder %s28, %s29
      %p43 = scmp.eq.s32.totalorder %s21, 1
      %p44 = por %p42, %p43
      %p46 = scmp.ne.s32.totalorder %s29, %s45
      %p47 = scmp.eq.s32.totalorder %s21, 0
      %p48 = por %p46, %p47
      %s49 = ssub.s32 %s15, %s22
      %p50 = scmp.eq.s32.totalorder %s49, 0
      %s52 = sadd.s32 %s51, 1
      %s53 = scalar_select %p50, %s51, %s52
      %p56 = pneg %p50
      %p57 = scmp.eq.s32.totalorder %s15, 1
      %p58 = por %p56, %p57
      %p59 = scmp.ne.s32.totalorder %s51, %s54
      %p60 = scmp.eq.s32.totalorder %s15, 0
      %p61 = por %p59, %p60
      %p62 = scmp.ne.s32.totalorder %s51, %s54
      %p63 = scmp.eq.s32.totalorder %s20, 1
      %p64 = por %p62, %p63
      %p65 = scmp.ne.s32.totalorder %s54, %s55
      %p66 = scmp.eq.s32.totalorder %s20, 0
      %p67 = por %p65, %p66
      %p68 = scmp.ne.s32.totalorder %s54, %s55
      %p69 = scmp.eq.s32.totalorder %s21, 1
      %p70 = por %p68, %p69
      %p72 = scmp.ne.s32.totalorder %s55, %s71
      %p73 = scmp.eq.s32.totalorder %s21, 0
      %p74 = por %p72, %p73
      %s76 = sadd.s32 %s75, 1
      %p79 = scmp.eq.s32.totalorder %s15, 1
      %p80 = scmp.ne.s32.totalorder %s75, %s77
      %p81 = scmp.eq.s32.totalorder %s15, 0
      %p82 = por %p80, %p81
      %p83 = scmp.ne.s32.totalorder %s75, %s77
      %p84 = scmp.eq.s32.totalorder %s20, 1
      %p85 = por %p83, %p84
      %p86 = scmp.ne.s32.totalorder %s77, %s78
      %p87 = scmp.eq.s32.totalorder %s20, 0
      %p88 = por %p86, %p87
      %p89 = scmp.ne.s32.totalorder %s77, %s78
      %p90 = scmp.eq.s32.totalorder %s21, 1
      %p91 = por %p89, %p90
      %p93 = scmp.ne.s32.totalorder %s78, %s92
      %p94 = scmp.eq.s32.totalorder %s21, 0
      %p95 = por %p93, %p94
      %s97 = sadd.s32 %s96, 1
      %p100 = scmp.eq.s32.totalorder %s15, 1
      %p101 = scmp.ne.s32.totalorder %s96, %s98
      %p102 = scmp.eq.s32.totalorder %s15, 0
      %p103 = por %p101, %p102
      %p104 = scmp.ne.s32.totalorder %s96, %s98
      %p105 = scmp.eq.s32.totalorder %s20, 1
      %p106 = por %p104, %p105
      %p107 = scmp.ne.s32.totalorder %s98, %s99
      %p108 = scmp.eq.s32.totalorder %s20, 0
      %p109 = por %p107, %p108
      %p110 = scmp.ne.s32.totalorder %s98, %s99
      %p111 = scmp.eq.s32.totalorder %s21, 1
      %p112 = por %p110, %p111
      %p114 = scmp.ne.s32.totalorder %s99, %s113
      %p115 = scmp.eq.s32.totalorder %s21, 0
      %p116 = por %p114, %p115
      %s118 = sadd.s32 %s117, 1
      %p121 = scmp.eq.s32.totalorder %s15, 1
      %p122 = scmp.ne.s32.totalorder %s117, %s119
      %p123 = scmp.eq.s32.totalorder %s15, 0
      %p124 = por %p122, %p123
      %p125 = scmp.ne.s32.totalorder %s117, %s119
      %p126 = scmp.eq.s32.totalorder %s20, 1
      %p127 = por %p125, %p126
      %p128 = scmp.ne.s32.totalorder %s119, %s120
      %p129 = scmp.eq.s32.totalorder %s20, 0
      %p130 = por %p128, %p129
      %p131 = scmp.ne.s32.totalorder %s119, %s120
      %p132 = scmp.eq.s32.totalorder %s21, 1
      %p133 = por %p131, %p132
      %p135 = scmp.ne.s32.totalorder %s120, %s134
      %p136 = scmp.eq.s32.totalorder %s21, 0
      %p137 = por %p135, %p136
      %s139 = sadd.s32 %s138, 1
      %p142 = scmp.eq.s32.totalorder %s15, 1
      %p143 = scmp.ne.s32.totalorder %s138, %s140
      %p144 = scmp.eq.s32.totalorder %s15, 0
      %p145 = por %p143, %p144
      %p146 = scmp.ne.s32.totalorder %s138, %s140
      %p147 = scmp.eq.s32.totalorder %s20, 1
      %p148 = por %p146, %p147
      %p149 = scmp.ne.s32.totalorder %s140, %s141
      %p150 = scmp.eq.s32.totalorder %s20, 0
      %p151 = por %p149, %p150
      %p152 = scmp.ne.s32.totalorder %s140, %s141
      %p153 = scmp.eq.s32.totalorder %s21, 1
      %p154 = por %p152, %p153
      %p156 = scmp.ne.s32.totalorder %s141, %s155
      %p157 = scmp.eq.s32.totalorder %s21, 0
      %p158 = por %p156, %p157
      %s159 = ssub.s32 %s15, %s22
      %p160 = scmp.eq.s32.totalorder %s159, 0
      %s162 = sadd.s32 %s161, 1
      %s163 = scalar_select %p160, %s161, %s162
      %p166 = pneg %p160
      %p167 = scmp.eq.s32.totalorder %s15, 1
      %p168 = por %p166, %p167
      %p169 = scmp.ne.s32.totalorder %s161, %s164
      %p170 = scmp.eq.s32.totalorder %s15, 0
      %p171 = por %p169, %p170
      %p172 = scmp.ne.s32.totalorder %s161, %s164
      %p173 = scmp.eq.s32.totalorder %s20, 1
      %p174 = por %p172, %p173
      %p175 = scmp.ne.s32.totalorder %s164, %s165
      %p176 = scmp.eq.s32.totalorder %s20, 0
      %p177 = por %p175, %p176
      %p178 = scmp.ne.s32.totalorder %s164, %s165
      %p179 = scmp.eq.s32.totalorder %s21, 1
      %p180 = por %p178, %p179
      %p182 = scmp.ne.s32.totalorder %s165, %s181
      %p183 = scmp.eq.s32.totalorder %s21, 0
      %p184 = por %p182, %p183
      %p185 = scmp.le.s32.totalorder 1, %s15
      %p186 = scmp.lt.s32.totalorder %s15, 3
      %p187 = pnand %p185, %p186
      %p188 = pneg %p187
      // Predicated region
      $region9: #{tpu_custom_call.1} parent=5 // pred_check
        _
      $region10: #{tpu_custom_call.1} parent=5 // pred_check_branch
        %190 = sbr.rel (%p187) target = $region12
      $region11: #{tpu_custom_call.1} parent=5 // pred_region
        %s191 = ssub.s32 %s15, 1
        // Predicated region
        $region13: #{tpu_custom_call.1} parent=11 // pred_check
          %p192 = pneg %p88
        $region14: #{tpu_custom_call.1} parent=11 // pred_check_branch
          %194 = sbr.rel (%p192) target = $region16
        $region15: #{tpu_custom_call.1} parent=11 // pred_region
          _
        $region16: #{tpu_custom_call.1} parent=11 // pred_fallthru
          _
        // Predicated region
        $region17: #{tpu_custom_call.1} parent=11 // pred_check
          %p195 = pneg %p109
        $region18: #{tpu_custom_call.1} parent=11 // pred_check_branch
          %197 = sbr.rel (%p195) target = $region20
        $region19: #{tpu_custom_call.1} parent=11 // pred_region
          _
        $region20: #{tpu_custom_call.1} parent=11 // pred_fallthru
          _
        // Predicated region
        $region21: #{tpu_custom_call.1} parent=11 // pred_check
          %p198 = pneg %p130
        $region22: #{tpu_custom_call.1} parent=11 // pred_check_branch
          %200 = sbr.rel (%p198) target = $region24
        $region23: #{tpu_custom_call.1} parent=11 // pred_region
          _
        $region24: #{tpu_custom_call.1} parent=11 // pred_fallthru
          _
        // Predicated region
        $region25: #{tpu_custom_call.1} parent=11 // pred_check
          %p201 = pneg %p151
        $region26: #{tpu_custom_call.1} parent=11 // pred_check_branch
          %203 = sbr.rel (%p201) target = $region28
        $region27: #{tpu_custom_call.1} parent=11 // pred_region
          _
        $region28: #{tpu_custom_call.1} parent=11 // pred_fallthru
          _
      $region12: #{tpu_custom_call.1} parent=5 // pred_fallthru
        _
      %p204 = scmp.lt.s32.totalorder %s15, 2
      // Predicated region
      $region29: #{tpu_custom_call.1} parent=5 // pred_check
        %p205 = pneg %p204
      $region30: #{tpu_custom_call.1} parent=5 // pred_check_branch
        %207 = sbr.rel (%p205) target = $region32
      $region31: #{tpu_custom_call.1} parent=5 // pred_region
        // Predicated region
        $region33: #{tpu_custom_call.1} parent=31 // pred_check
          %p208 = pneg %p35
        $region34: #{tpu_custom_call.1} parent=31 // pred_check_branch
          %210 = sbr.rel (%p208) target = $region36
        $region35: #{tpu_custom_call.1} parent=31 // pred_region
          %s211 = smul.u32 16, %s15
          %p212 = scmp.lt.s32.totalorder %s211, 31
          %s213 = scalar_select %p212, %s211, 31
          %s214 = smul.addr %s213, 8
          %s215 = scalar_lea.vmem %s0, %s214
          %s216 = smul.u32 16, %s15
        $region36: #{tpu_custom_call.1} parent=31 // pred_fallthru
          _
        // Predicated region
        $region37: #{tpu_custom_call.1} parent=31 // pred_check
          %p217 = pneg %p61
        $region38: #{tpu_custom_call.1} parent=31 // pred_check_branch
          %219 = sbr.rel (%p217) target = $region40
        $region39: #{tpu_custom_call.1} parent=31 // pred_region
          %s220 = smul.u32 16, %s15
          %p221 = scmp.lt.s32.totalorder %s220, 31
          %s222 = scalar_select %p221, %s220, 31
          %s223 = smul.addr %s222, 8
          %s224 = scalar_lea.vmem %s1, %s223
          %s225 = smul.u32 16, %s15
        $region40: #{tpu_custom_call.1} parent=31 // pred_fallthru
          _
      $region32: #{tpu_custom_call.1} parent=5 // pred_fallthru
        _
      %p226 = scmp.le.s32.totalorder 1, %s15
      %p227 = scmp.lt.s32.totalorder %s15, 3
      %p228 = pnand %p226, %p227
      %p229 = pneg %p228
      // Predicated region
      $region41: #{tpu_custom_call.1} parent=5 // pred_check
        _
      $region42: #{tpu_custom_call.1} parent=5 // pred_check_branch
        %231 = sbr.rel (%p228) target = $region44
      $region43: #{tpu_custom_call.1} parent=5 // pred_region
        %s232 = ssub.s32 %s15, 1
        %s233 = smul.u32 16, %s20
        %p234 = scmp.lt.s32.totalorder %s233, 31
        %s235 = scalar_select %p234, %s233, 31
        %s236 = smul.addr %s235, 8
        %s237 = scalar_lea.vmem %s0, %s236
        %p238 = pneg %p41
        %p239 = pneg %p38
        %s240 = smul.u32 16, %s20
        %p241 = scmp.lt.s32.totalorder %s240, 31
        %s242 = scalar_select %p241, %s240, 31
        %s243 = smul.addr %s242, 8
        %s244 = scalar_lea.vmem %s1, %s243
        %p245 = pneg %p67
        %p246 = pneg %p64
        %p247 = pneg %p88
        %p248 = pneg %p85
        %p249 = pneg %p109
        %p250 = pneg %p106
        %p251 = pneg %p130
        %p252 = pneg %p127
        %p253 = pneg %p151
        %p254 = pneg %p148
        %p255 = pneg %p177
        %p256 = pneg %p174
        %s257 = sand.u32 %s164, 1
        %s258 = scalar_lea.sflag [#allocation3], %s257
        %s259 = sand.u32 %s164, 1
        %s260 = smul.addr %s259, 256
        %s261 = scalar_lea.vmem [#allocation2], %s260
        %s262 = smul.u32 16, %s20
        %p263 = scmp.lt.s32.totalorder %s262, 31
        %s264 = scalar_select %p263, %s262, 31
        %s265 = smul.addr %s264, 8
        %s266 = scalar_lea.vmem %s0, %s265
        %s267 = smul.u32 16, %s20
        %s268 = smul.u32 16, %s20
        %p269 = scmp.lt.s32.totalorder %s268, 31
        %s270 = scalar_select %p269, %s268, 31
        %s271 = smul.addr %s270, 8
        %s272 = scalar_lea.vmem %s1, %s271
        %s273 = smul.u32 16, %s20
        %s274 = smul.u32 16, %s20
        %v276 = vld [vmem:[%s266] sm:$0xff]
        %v277 = vld [vmem:[%s266 + $0x8] sm:$0xff]
        %v278 = vld [vmem:[%s266 + $0x10] sm:$0xff]
        %v279 = vld [vmem:[%s266 + $0x18] sm:$0xff]
        %v280 = vld [vmem:[%s266 + $0x20] sm:$0xff]
        %v281 = vld [vmem:[%s266 + $0x28] sm:$0xff]
        %v282 = vld [vmem:[%s266 + $0x30] sm:$0xff]
        %v283 = vld [vmem:[%s266 + $0x38] sm:$0xff]
        %v284 = vld [vmem:[%s266 + $0x40] sm:$0xff]
        %v285 = vld [vmem:[%s266 + $0x48] sm:$0xff]
        %v286 = vld [vmem:[%s266 + $0x50] sm:$0xff]
        %v287 = vld [vmem:[%s266 + $0x58] sm:$0xff]
        %v288 = vld [vmem:[%s266 + $0x60] sm:$0xff]
        %v289 = vld [vmem:[%s266 + $0x68] sm:$0xff]
        %v290 = vld [vmem:[%s266 + $0x70] sm:$0xff]
        %v291 = vld [vmem:[%s266 + $0x78] sm:$0xff]
        %v292 = vld [vmem:[%s272] sm:$0xff]
        %v293 = vld [vmem:[%s272 + $0x8] sm:$0xff]
        %v294 = vld [vmem:[%s272 + $0x10] sm:$0xff]
        %v295 = vld [vmem:[%s272 + $0x18] sm:$0xff]
        %v296 = vld [vmem:[%s272 + $0x20] sm:$0xff]
        %v297 = vld [vmem:[%s272 + $0x28] sm:$0xff]
        %v298 = vld [vmem:[%s272 + $0x30] sm:$0xff]
        %v299 = vld [vmem:[%s272 + $0x38] sm:$0xff]
        %v300 = vld [vmem:[%s272 + $0x40] sm:$0xff]
        %v301 = vld [vmem:[%s272 + $0x48] sm:$0xff]
        %v302 = vld [vmem:[%s272 + $0x50] sm:$0xff]
        %v303 = vld [vmem:[%s272 + $0x58] sm:$0xff]
        %v304 = vld [vmem:[%s272 + $0x60] sm:$0xff]
        %v305 = vld [vmem:[%s272 + $0x68] sm:$0xff]
        %v306 = vld [vmem:[%s272 + $0x70] sm:$0xff]
        %v307 = vld [vmem:[%s272 + $0x78] sm:$0xff]
        %324 = vrot.lane.b32.xlu0 %v292, 16
        %v325 = vpop.permute.xlu0 %324
        %326 = vrot.lane.b32.xlu0 %v293, 16
        %v327 = vpop.permute.xlu0 %326
        %328 = vrot.lane.b32.xlu0 %v294, 16
        %v329 = vpop.permute.xlu0 %328
        %330 = vrot.lane.b32.xlu0 %v295, 16
        %v331 = vpop.permute.xlu0 %330
        %332 = vrot.lane.b32.xlu0 %v296, 16
        %v333 = vpop.permute.xlu0 %332
        %334 = vrot.lane.b32.xlu0 %v297, 16
        %v335 = vpop.permute.xlu0 %334
        %336 = vrot.lane.b32.xlu0 %v298, 16
        %v337 = vpop.permute.xlu0 %336
        %338 = vrot.lane.b32.xlu0 %v299, 16
        %v339 = vpop.permute.xlu0 %338
        %340 = vrot.lane.b32.xlu0 %v300, 16
        %v341 = vpop.permute.xlu0 %340
        %342 = vrot.lane.b32.xlu0 %v301, 16
        %v343 = vpop.permute.xlu0 %342
        %344 = vrot.lane.b32.xlu0 %v302, 16
        %v345 = vpop.permute.xlu0 %344
        %346 = vrot.lane.b32.xlu0 %v303, 16
        %v347 = vpop.permute.xlu0 %346
        %348 = vrot.lane.b32.xlu0 %v304, 16
        %v349 = vpop.permute.xlu0 %348
        %350 = vrot.lane.b32.xlu0 %v305, 16
        %v351 = vpop.permute.xlu0 %350
        %352 = vrot.lane.b32.xlu0 %v306, 16
        %v353 = vpop.permute.xlu0 %352
        %354 = vrot.lane.b32.xlu0 %v307, 16
        %v355 = vpop.permute.xlu0 %354
        %vm372 = vcmask 130048
        %v373 = vsel %vm372, %v276, %v325
        %v374 = vsel %vm372, %v277, %v327
        %v375 = vsel %vm372, %v278, %v329
        %v376 = vsel %vm372, %v279, %v331
        %v377 = vsel %vm372, %v280, %v333
        %v378 = vsel %vm372, %v281, %v335
        %v379 = vsel %vm372, %v282, %v337
        %v380 = vsel %vm372, %v283, %v339
        %v381 = vsel %vm372, %v284, %v341
        %v382 = vsel %vm372, %v285, %v343
        %v383 = vsel %vm372, %v286, %v345
        %v384 = vsel %vm372, %v287, %v347
        %v385 = vsel %vm372, %v288, %v349
        %v386 = vsel %vm372, %v289, %v351
        %v387 = vsel %vm372, %v290, %v353
        %v388 = vsel %vm372, %v291, %v355
        %v389 = vpack.c.bf16 %v374, %v373
        %v390 = vpack.c.bf16 %v376, %v375
        %v391 = vpack.c.bf16 %v378, %v377
        %v392 = vpack.c.bf16 %v380, %v379
        %v393 = vpack.c.bf16 %v382, %v381
        %v394 = vpack.c.bf16 %v384, %v383
        %v395 = vpack.c.bf16 %v386, %v385
        %v396 = vpack.c.bf16 %v388, %v387
        %v397 = vld [vmem:[%s2] sm:$0xff]
        %v398 = vld [vmem:[%s2 + $0x8] sm:$0xff]
        %v399 = vld [vmem:[%s2 + $0x10] sm:$0xff]
        %v400 = vld [vmem:[%s2 + $0x18] sm:$0xff]
        %v401 = vld [vmem:[%s3] sm:$0x3]
        %v403 = vlaneseq
        %v404 = vshrl.u32 %v403, 7
        %v405 = vsub.s32 0, %v404
        %v406 = vrot.slane %v401, %v405
        %v407 = vlaneseq
        %v408 = vshrl.u32 %v407, 7
        %v409 = vsub.s32 1, %v408
        %v410 = vrot.slane %v401, %v409
        %v417 = vunpack.c.l.b16 %v397
        %v418 = vunpack.c.h.b16 %v397
        %v419 = vunpack.c.l.b16 %v398
        %v420 = vunpack.c.h.b16 %v398
        %v421 = vunpack.c.l.b16 %v399
        %v422 = vunpack.c.h.b16 %v399
        %v423 = vunpack.c.l.b16 %v400
        %v424 = vunpack.c.h.b16 %v400
        %v425 = vpack.c.b16 %v419, %v417
        %v426 = vpack.c.b16 %v420, %v418
        %v427 = vpack.c.b16 %v423, %v421
        %v428 = vpack.c.b16 %v424, %v422
        %vm433 = vcmask 261120
        %v435 = vsel %vm433, %v389, 0
        %v438 = vsel %vm433, %v390, 0
        %v441 = vsel %vm433, %v391, 0
        %v444 = vsel %vm433, %v392, 0
        %v447 = vsel %vm433, %v393, 0
        %v450 = vsel %vm433, %v394, 0
        %v453 = vsel %vm433, %v395, 0
        %v456 = vsel %vm433, %v396, 0
        %458 = vmatprep.subr.bf16.mxu0 %v426
        %459 = vmatpush1.bf16.msra.mxu0 %v425
        %460 = vmatprep.subr.bf16.mxu0 %v428
        %461 = vmatpush1.bf16.msra.mxu0 %v427
        %462 = vmatprep.subr.bf16.mxu0 0
        %463 = vmatpush1.bf16.msra.mxu0 0
        %464 = vmatprep.subr.bf16.mxu0 0
        %465 = vmatpush1.bf16.msra.mxu0 0
        %466 = vmatprep.subr.bf16.mxu0 0
        %467 = vmatpush1.bf16.msra.mxu0 0
        %468 = vmatprep.subr.bf16.mxu0 0
        %469 = vmatpush1.bf16.msra.mxu0 0
        %470 = vmatprep.subr.bf16.mxu0 0
        %471 = vmatpush1.bf16.msra.mxu0 0
        %472 = vmatprep.subr.bf16.mxu0 0
        %473 = vmatpush1.bf16.msra.mxu0 0
        %474 = vmatprep.subr.bf16.mxu0 0
        %475 = vmatpush1.bf16.msra.mxu0 0
        %476 = vmatprep.subr.bf16.mxu0 0
        %477 = vmatpush1.bf16.msra.mxu0 0
        %478 = vmatprep.subr.bf16.mxu0 0
        %479 = vmatpush1.bf16.msra.mxu0 0
        %480 = vmatprep.subr.bf16.mxu0 0
        %481 = vmatpush1.bf16.msra.mxu0 0
        %482 = vmatprep.subr.bf16.mxu0 0
        %483 = vmatpush1.bf16.msra.mxu0 0
        %484 = vmatprep.subr.bf16.mxu0 0
        %485 = vmatpush1.bf16.msra.mxu0 0
        %486 = vmatprep.subr.bf16.mxu0 0
        %487 = vmatpush1.bf16.msra.mxu0 0
        %488 = vmatprep.subr.bf16.mxu0 0
        %489 = vmatpush1.bf16.msra.mxu0 0
        %490 = vmatprep.mubr.bf16.mxu0 0
        %491 = vmatmul.mubr.bf16.gmra.mrb[0].mxu0 %v435
        %v492 = vpop.f32.mrb[0].mxu0
        %v493 = vadd.f32 %v406, %v492
        %v494 = vpop.f32.mrb[0].mxu0
        %v495 = vadd.f32 %v410, %v494
        %v496 = vpop.f32.mrb[0].mxu0
        %v497 = vadd.f32 %v406, %v496
        %v498 = vpop.f32.mrb[0].mxu0
        %v499 = vadd.f32 %v410, %v498
        %500 = vmatprep.mubr.bf16.mxu0 0
        %501 = vmatmul.mubr.bf16.gmra.mrb[0].mxu0 %v438
        %v502 = vpop.f32.mrb[0].mxu0
        %v503 = vadd.f32 %v406, %v502
        %v504 = vpop.f32.mrb[0].mxu0
        %v505 = vadd.f32 %v410, %v504
        %v506 = vpop.f32.mrb[0].mxu0
        %v507 = vadd.f32 %v406, %v506
        %v508 = vpop.f32.mrb[0].mxu0
        %v509 = vadd.f32 %v410, %v508
        %510 = vmatprep.mubr.bf16.mxu0 0
        %511 = vmatmul.mubr.bf16.gmra.mrb[0].mxu0 %v441
        %v512 = vpop.f32.mrb[0].mxu0
        %v513 = vadd.f32 %v406, %v512
        %v514 = vpop.f32.mrb[0].mxu0
        %v515 = vadd.f32 %v410, %v514
        %v516 = vpop.f32.mrb[0].mxu0
        %v517 = vadd.f32 %v406, %v516
        %v518 = vpop.f32.mrb[0].mxu0
        %v519 = vadd.f32 %v410, %v518
        %520 = vmatprep.mubr.bf16.mxu0 0
        %521 = vmatmul.mubr.bf16.gmra.mrb[0].mxu0 %v444
        %v522 = vpop.f32.mrb[0].mxu0
        %v523 = vadd.f32 %v406, %v522
        %v524 = vpop.f32.mrb[0].mxu0
        %v525 = vadd.f32 %v410, %v524
        %v526 = vpop.f32.mrb[0].mxu0
        %v527 = vadd.f32 %v406, %v526
        %v528 = vpop.f32.mrb[0].mxu0
        %v529 = vadd.f32 %v410, %v528
        %530 = vmatprep.mubr.bf16.mxu0 0
        %531 = vmatmul.mubr.bf16.gmra.mrb[0].mxu0 %v447
        %v532 = vpop.f32.mrb[0].mxu0
        %v533 = vadd.f32 %v406, %v532
        %v534 = vpop.f32.mrb[0].mxu0
        %v535 = vadd.f32 %v410, %v534
        %v536 = vpop.f32.mrb[0].mxu0
        %v537 = vadd.f32 %v406, %v536
        %v538 = vpop.f32.mrb[0].mxu0
        %v539 = vadd.f32 %v410, %v538
        %540 = vmatprep.mubr.bf16.mxu0 0
        %541 = vmatmul.mubr.bf16.gmra.mrb[0].mxu0 %v450
        %v542 = vpop.f32.mrb[0].mxu0
        %v543 = vadd.f32 %v406, %v542
        %v544 = vpop.f32.mrb[0].mxu0
        %v545 = vadd.f32 %v410, %v544
        %v546 = vpop.f32.mrb[0].mxu0
        %v547 = vadd.f32 %v406, %v546
        %v548 = vpop.f32.mrb[0].mxu0
        %v549 = vadd.f32 %v410, %v548
        %550 = vmatprep.mubr.bf16.mxu0 0
        %551 = vmatmul.mubr.bf16.gmra.mrb[0].mxu0 %v453
        %v552 = vpop.f32.mrb[0].mxu0
        %v553 = vadd.f32 %v406, %v552
        %v554 = vpop.f32.mrb[0].mxu0
        %v555 = vadd.f32 %v410, %v554
        %v556 = vpop.f32.mrb[0].mxu0
        %v557 = vadd.f32 %v406, %v556
        %v558 = vpop.f32.mrb[0].mxu0
        %v559 = vadd.f32 %v410, %v558
        %560 = vmatprep.mubr.bf16.mxu0 0
        %561 = vmatmul.mubr.bf16.gmra.mrb[0].mxu0 %v456
        %v562 = vpop.f32.mrb[0].mxu0
        %v563 = vadd.f32 %v406, %v562
        %v564 = vpop.f32.mrb[0].mxu0
        %v565 = vadd.f32 %v410, %v564
        %v566 = vpop.f32.mrb[0].mxu0
        %v567 = vadd.f32 %v406, %v566
        %v568 = vpop.f32.mrb[0].mxu0
        %v569 = vadd.f32 %v410, %v568
        %570 = vdwg.mxu0
        %v571 = vmax.f32 %v493, 0.0
        %v572 = vmax.f32 %v495, 0.0
        %v573 = vmax.f32 %v497, 0.0
        %v574 = vmax.f32 %v499, 0.0
        %v575 = vmax.f32 %v503, 0.0
        %v576 = vmax.f32 %v505, 0.0
        %v577 = vmax.f32 %v507, 0.0
        %v578 = vmax.f32 %v509, 0.0
        %v579 = vmax.f32 %v513, 0.0
        %v580 = vmax.f32 %v515, 0.0
        %v581 = vmax.f32 %v517, 0.0
        %v582 = vmax.f32 %v519, 0.0
        %v583 = vmax.f32 %v523, 0.0
        %v584 = vmax.f32 %v525, 0.0
        %v585 = vmax.f32 %v527, 0.0
        %v586 = vmax.f32 %v529, 0.0
        %v587 = vmax.f32 %v533, 0.0
        %v588 = vmax.f32 %v535, 0.0
        %v589 = vmax.f32 %v537, 0.0
        %v590 = vmax.f32 %v539, 0.0
        %v591 = vmax.f32 %v543, 0.0
        %v592 = vmax.f32 %v545, 0.0
        %v593 = vmax.f32 %v547, 0.0
        %v594 = vmax.f32 %v549, 0.0
        %v595 = vmax.f32 %v553, 0.0
        %v596 = vmax.f32 %v555, 0.0
        %v597 = vmax.f32 %v557, 0.0
        %v598 = vmax.f32 %v559, 0.0
        %v599 = vmax.f32 %v563, 0.0
        %v600 = vmax.f32 %v565, 0.0
        %v601 = vmax.f32 %v567, 0.0
        %v602 = vmax.f32 %v569, 0.0
        %v603 = vpack.c.bf16 %v573, %v571
        %v604 = vpack.c.bf16 %v574, %v572
        %v605 = vpack.c.bf16 %v577, %v575
        %v606 = vpack.c.bf16 %v578, %v576
        %v607 = vpack.c.bf16 %v581, %v579
        %v608 = vpack.c.bf16 %v582, %v580
        %v609 = vpack.c.bf16 %v585, %v583
        %v610 = vpack.c.bf16 %v586, %v584
        %v611 = vpack.c.bf16 %v589, %v587
        %v612 = vpack.c.bf16 %v590, %v588
        %v613 = vpack.c.bf16 %v593, %v591
        %v614 = vpack.c.bf16 %v594, %v592
        %v615 = vpack.c.bf16 %v597, %v595
        %v616 = vpack.c.bf16 %v598, %v596
        %v617 = vpack.c.bf16 %v601, %v599
        %v618 = vpack.c.bf16 %v602, %v600
        %v619 = vld [vmem:[%s4] sm:$0xff]
        %v620 = vld [vmem:[%s4 + $0x8] sm:$0xff]
        %v621 = vld [vmem:[%s4 + $0x10] sm:$0xff]
        %v622 = vld [vmem:[%s4 + $0x18] sm:$0xff]
        %v623 = vld [vmem:[%s4 + $0x20] sm:$0xff]
        %v624 = vld [vmem:[%s4 + $0x28] sm:$0xff]
        %v625 = vld [vmem:[%s4 + $0x30] sm:$0xff]
        %v626 = vld [vmem:[%s4 + $0x38] sm:$0xff]
        %v627 = vld [vmem:[%s4 + $0x40] sm:$0xff]
        %v628 = vld [vmem:[%s4 + $0x48] sm:$0xff]
        %v629 = vld [vmem:[%s4 + $0x50] sm:$0xff]
        %v630 = vld [vmem:[%s4 + $0x58] sm:$0xff]
        %v631 = vld [vmem:[%s4 + $0x60] sm:$0xff]
        %v632 = vld [vmem:[%s4 + $0x68] sm:$0xff]
        %v633 = vld [vmem:[%s4 + $0x70] sm:$0xff]
        %v634 = vld [vmem:[%s4 + $0x78] sm:$0xff]
        %v635 = vld [vmem:[%s4 + $0x80] sm:$0xff]
        %v636 = vld [vmem:[%s4 + $0x88] sm:$0xff]
        %v637 = vld [vmem:[%s4 + $0x90] sm:$0xff]
        %v638 = vld [vmem:[%s4 + $0x98] sm:$0xff]
        %v639 = vld [vmem:[%s4 + $0xa0] sm:$0xff]
        %v640 = vld [vmem:[%s4 + $0xa8] sm:$0xff]
        %v641 = vld [vmem:[%s4 + $0xb0] sm:$0xff]
        %v642 = vld [vmem:[%s4 + $0xb8] sm:$0xff]
        %v643 = vld [vmem:[%s4 + $0xc0] sm:$0xff]
        %v644 = vld [vmem:[%s4 + $0xc8] sm:$0xff]
        %v645 = vld [vmem:[%s4 + $0xd0] sm:$0xff]
        %v646 = vld [vmem:[%s4 + $0xd8] sm:$0xff]
        %v647 = vld [vmem:[%s4 + $0xe0] sm:$0xff]
        %v648 = vld [vmem:[%s4 + $0xe8] sm:$0xff]
        %v649 = vld [vmem:[%s4 + $0xf0] sm:$0xff]
        %v650 = vld [vmem:[%s4 + $0xf8] sm:$0xff]
        %v651 = vld [vmem:[%s5] sm:$0x3]
        %v653 = vlaneseq
        %v654 = vshrl.u32 %v653, 7
        %v655 = vsub.s32 0, %v654
        %v656 = vrot.slane %v651, %v655
        %v657 = vlaneseq
        %v658 = vshrl.u32 %v657, 7
        %v659 = vsub.s32 1, %v658
        %v660 = vrot.slane %v651, %v659
        %v695 = vunpack.c.l.b16 %v619
        %v696 = vunpack.c.h.b16 %v619
        %v697 = vunpack.c.l.b16 %v620
        %v698 = vunpack.c.h.b16 %v620
        %v699 = vunpack.c.l.b16 %v621
        %v700 = vunpack.c.h.b16 %v621
        %v701 = vunpack.c.l.b16 %v622
        %v702 = vunpack.c.h.b16 %v622
        %v703 = vunpack.c.l.b16 %v623
        %v704 = vunpack.c.h.b16 %v623
        %v705 = vunpack.c.l.b16 %v624
        %v706 = vunpack.c.h.b16 %v624
        %v707 = vunpack.c.l.b16 %v625
        %v708 = vunpack.c.h.b16 %v625
        %v709 = vunpack.c.l.b16 %v626
        %v710 = vunpack.c.h.b16 %v626
        %v711 = vunpack.c.l.b16 %v627
        %v712 = vunpack.c.h.b16 %v627
        %v713 = vunpack.c.l.b16 %v628
        %v714 = vunpack.c.h.b16 %v628
        %v715 = vunpack.c.l.b16 %v629
        %v716 = vunpack.c.h.b16 %v629
        %v717 = vunpack.c.l.b16 %v630
        %v718 = vunpack.c.h.b16 %v630
        %v719 = vunpack.c.l.b16 %v631
        %v720 = vunpack.c.h.b16 %v631
        %v721 = vunpack.c.l.b16 %v632
        %v722 = vunpack.c.h.b16 %v632
        %v723 = vunpack.c.l.b16 %v633
        %v724 = vunpack.c.h.b16 %v633
        %v725 = vunpack.c.l.b16 %v634
        %v726 = vunpack.c.h.b16 %v634
        %v727 = vunpack.c.l.b16 %v635
        %v728 = vunpack.c.h.b16 %v635
        %v729 = vunpack.c.l.b16 %v636
        %v730 = vunpack.c.h.b16 %v636
        %v731 = vunpack.c.l.b16 %v637
        %v732 = vunpack.c.h.b16 %v637
        %v733 = vunpack.c.l.b16 %v638
        %v734 = vunpack.c.h.b16 %v638
        %v735 = vunpack.c.l.b16 %v639
        %v736 = vunpack.c.h.b16 %v639
        %v737 = vunpack.c.l.b16 %v640
        %v738 = vunpack.c.h.b16 %v640
        %v739 = vunpack.c.l.b16 %v641
        %v740 = vunpack.c.h.b16 %v641
        %v741 = vunpack.c.l.b16 %v642
        %v742 = vunpack.c.h.b16 %v642
        %v743 = vunpack.c.l.b16 %v643
        %v744 = vunpack.c.h.b16 %v643
        %v745 = vunpack.c.l.b16 %v644
        %v746 = vunpack.c.h.b16 %v644
        %v747 = vunpack.c.l.b16 %v645
        %v748 = vunpack.c.h.b16 %v645
        %v749 = vunpack.c.l.b16 %v646
        %v750 = vunpack.c.h.b16 %v646
        %v751 = vunpack.c.l.b16 %v647
        %v752 = vunpack.c.h.b16 %v647
        %v753 = vunpack.c.l.b16 %v648
        %v754 = vunpack.c.h.b16 %v648
        %v755 = vunpack.c.l.b16 %v649
        %v756 = vunpack.c.h.b16 %v649
        %v757 = vunpack.c.l.b16 %v650
        %v758 = vunpack.c.h.b16 %v650
        %v759 = vpack.c.b16 %v697, %v695
        %v760 = vpack.c.b16 %v698, %v696
        %v761 = vpack.c.b16 %v701, %v699
        %v762 = vpack.c.b16 %v702, %v700
        %v763 = vpack.c.b16 %v705, %v703
        %v764 = vpack.c.b16 %v706, %v704
        %v765 = vpack.c.b16 %v709, %v707
        %v766 = vpack.c.b16 %v710, %v708
        %v767 = vpack.c.b16 %v713, %v711
        %v768 = vpack.c.b16 %v714, %v712
        %v769 = vpack.c.b16 %v717, %v715
        %v770 = vpack.c.b16 %v718, %v716
        %v771 = vpack.c.b16 %v721, %v719
        %v772 = vpack.c.b16 %v722, %v720
        %v773 = vpack.c.b16 %v725, %v723
        %v774 = vpack.c.b16 %v726, %v724
        %v775 = vpack.c.b16 %v729, %v727
        %v776 = vpack.c.b16 %v730, %v728
        %v777 = vpack.c.b16 %v733, %v731
        %v778 = vpack.c.b16 %v734, %v732
        %v779 = vpack.c.b16 %v737, %v735
        %v780 = vpack.c.b16 %v738, %v736
        %v781 = vpack.c.b16 %v741, %v739
        %v782 = vpack.c.b16 %v742, %v740
        %v783 = vpack.c.b16 %v745, %v743
        %v784 = vpack.c.b16 %v746, %v744
        %v785 = vpack.c.b16 %v749, %v747
        %v786 = vpack.c.b16 %v750, %v748
        %v787 = vpack.c.b16 %v753, %v751
        %v788 = vpack.c.b16 %v754, %v752
        %v789 = vpack.c.b16 %v757, %v755
        %v790 = vpack.c.b16 %v758, %v756
        %823 = vmatprep.subr.bf16.mxu0 %v760
        %824 = vmatpush1.bf16.msra.mxu0 %v759
        %825 = vmatprep.subr.bf16.mxu0 %v762
        %826 = vmatpush1.bf16.msra.mxu0 %v761
        %827 = vmatprep.subr.bf16.mxu0 %v764
        %828 = vmatpush1.bf16.msra.mxu0 %v763
        %829 = vmatprep.subr.bf16.mxu0 %v766
        %830 = vmatpush1.bf16.msra.mxu0 %v765
        %831 = vmatprep.subr.bf16.mxu0 %v768
        %832 = vmatpush1.bf16.msra.mxu0 %v767
        %833 = vmatprep.subr.bf16.mxu0 %v770
        %834 = vmatpush1.bf16.msra.mxu0 %v769
        %835 = vmatprep.subr.bf16.mxu0 %v772
        %836 = vmatpush1.bf16.msra.mxu0 %v771
        %837 = vmatprep.subr.bf16.mxu0 %v774
        %838 = vmatpush1.bf16.msra.mxu0 %v773
        %839 = vmatprep.subr.bf16.mxu0 %v776
        %840 = vmatpush1.bf16.msra.mxu0 %v775
        %841 = vmatprep.subr.bf16.mxu0 %v778
        %842 = vmatpush1.bf16.msra.mxu0 %v777
        %843 = vmatprep.subr.bf16.mxu0 %v780
        %844 = vmatpush1.bf16.msra.mxu0 %v779
        %845 = vmatprep.subr.bf16.mxu0 %v782
        %846 = vmatpush1.bf16.msra.mxu0 %v781
        %847 = vmatprep.subr.bf16.mxu0 %v784
        %848 = vmatpush1.bf16.msra.mxu0 %v783
        %849 = vmatprep.subr.bf16.mxu0 %v786
        %850 = vmatpush1.bf16.msra.mxu0 %v785
        %851 = vmatprep.subr.bf16.mxu0 %v788
        %852 = vmatpush1.bf16.msra.mxu0 %v787
        %853 = vmatprep.subr.bf16.mxu0 %v790
        %854 = vmatpush1.bf16.msra.mxu0 %v789
        %855 = vmatprep.mubr.bf16.mxu0 %v604
        %856 = vmatmul.mubr.bf16.gmra.mrb[0].mxu0 %v603
        %v857 = vpop.f32.mrb[0].mxu0
        %v858 = vadd.f32 %v656, %v857
        %v859 = vpop.f32.mrb[0].mxu0
        %v860 = vadd.f32 %v660, %v859
        %v861 = vpop.f32.mrb[0].mxu0
        %v862 = vadd.f32 %v656, %v861
        %v863 = vpop.f32.mrb[0].mxu0
        %v864 = vadd.f32 %v660, %v863
        %865 = vmatprep.mubr.bf16.mxu0 %v606
        %866 = vmatmul.mubr.bf16.gmra.mrb[0].mxu0 %v605
        %v867 = vpop.f32.mrb[0].mxu0
        %v868 = vadd.f32 %v656, %v867
        %v869 = vpop.f32.mrb[0].mxu0
        %v870 = vadd.f32 %v660, %v869
        %v871 = vpop.f32.mrb[0].mxu0
        %v872 = vadd.f32 %v656, %v871
        %v873 = vpop.f32.mrb[0].mxu0
        %v874 = vadd.f32 %v660, %v873
        %875 = vmatprep.mubr.bf16.mxu0 %v608
        %876 = vmatmul.mubr.bf16.gmra.mrb[0].mxu0 %v607
        %v877 = vpop.f32.mrb[0].mxu0
        %v878 = vadd.f32 %v656, %v877
        %v879 = vpop.f32.mrb[0].mxu0
        %v880 = vadd.f32 %v660, %v879
        %v881 = vpop.f32.mrb[0].mxu0
        %v882 = vadd.f32 %v656, %v881
        %v883 = vpop.f32.mrb[0].mxu0
        %v884 = vadd.f32 %v660, %v883
        %885 = vmatprep.mubr.bf16.mxu0 %v610
        %886 = vmatmul.mubr.bf16.gmra.mrb[0].mxu0 %v609
        %v887 = vpop.f32.mrb[0].mxu0
        %v888 = vadd.f32 %v656, %v887
        %v889 = vpop.f32.mrb[0].mxu0
        %v890 = vadd.f32 %v660, %v889
        %v891 = vpop.f32.mrb[0].mxu0
        %v892 = vadd.f32 %v656, %v891
        %v893 = vpop.f32.mrb[0].mxu0
        %v894 = vadd.f32 %v660, %v893
        %895 = vmatprep.mubr.bf16.mxu0 %v612
        %896 = vmatmul.mubr.bf16.gmra.mrb[0].mxu0 %v611
        %v897 = vpop.f32.mrb[0].mxu0
        %v898 = vadd.f32 %v656, %v897
        %v899 = vpop.f32.mrb[0].mxu0
        %v900 = vadd.f32 %v660, %v899
        %v901 = vpop.f32.mrb[0].mxu0
        %v902 = vadd.f32 %v656, %v901
        %v903 = vpop.f32.mrb[0].mxu0
        %v904 = vadd.f32 %v660, %v903
        %905 = vmatprep.mubr.bf16.mxu0 %v614
        %906 = vmatmul.mubr.bf16.gmra.mrb[0].mxu0 %v613
        %v907 = vpop.f32.mrb[0].mxu0
        %v908 = vadd.f32 %v656, %v907
        %v909 = vpop.f32.mrb[0].mxu0
        %v910 = vadd.f32 %v660, %v909
        %v911 = vpop.f32.mrb[0].mxu0
        %v912 = vadd.f32 %v656, %v911
        %v913 = vpop.f32.mrb[0].mxu0
        %v914 = vadd.f32 %v660, %v913
        %915 = vmatprep.mubr.bf16.mxu0 %v616
        %916 = vmatmul.mubr.bf16.gmra.mrb[0].mxu0 %v615
        %v917 = vpop.f32.mrb[0].mxu0
        %v918 = vadd.f32 %v656, %v917
        %v919 = vpop.f32.mrb[0].mxu0
        %v920 = vadd.f32 %v660, %v919
        %v921 = vpop.f32.mrb[0].mxu0
        %v922 = vadd.f32 %v656, %v921
        %v923 = vpop.f32.mrb[0].mxu0
        %v924 = vadd.f32 %v660, %v923
        %925 = vmatprep.mubr.bf16.mxu0 %v618
        %926 = vmatmul.mubr.bf16.gmra.mrb[0].mxu0 %v617
        %v927 = vpop.f32.mrb[0].mxu0
        %v928 = vadd.f32 %v656, %v927
        %v929 = vpop.f32.mrb[0].mxu0
        %v930 = vadd.f32 %v660, %v929
        %v931 = vpop.f32.mrb[0].mxu0
        %v932 = vadd.f32 %v656, %v931
        %v933 = vpop.f32.mrb[0].mxu0
        %v934 = vadd.f32 %v660, %v933
        %935 = vdwg.mxu0
        %v936 = vmul.f32 %v858, 1.442695
        %v937 = vpow.pop %v936
        %v938 = vmul.f32 %v860, 1.442695
        %v939 = vpow.pop %v938
        %v940 = vmul.f32 %v862, 1.442695
        %v941 = vpow.pop %v940
        %v942 = vmul.f32 %v864, 1.442695
        %v943 = vpow.pop %v942
        %v944 = vmul.f32 %v868, 1.442695
        %v945 = vpow.pop %v944
        %v946 = vmul.f32 %v870, 1.442695
        %v947 = vpow.pop %v946
        %v948 = vmul.f32 %v872, 1.442695
        %v949 = vpow.pop %v948
        %v950 = vmul.f32 %v874, 1.442695
        %v951 = vpow.pop %v950
        %v952 = vmul.f32 %v878, 1.442695
        %v953 = vpow.pop %v952
        %v954 = vmul.f32 %v880, 1.442695
        %v955 = vpow.pop %v954
        %v956 = vmul.f32 %v882, 1.442695
        %v957 = vpow.pop %v956
        %v958 = vmul.f32 %v884, 1.442695
        %v959 = vpow.pop %v958
        %v960 = vmul.f32 %v888, 1.442695
        %v961 = vpow.pop %v960
        %v962 = vmul.f32 %v890, 1.442695
        %v963 = vpow.pop %v962
        %v964 = vmul.f32 %v892, 1.442695
        %v965 = vpow.pop %v964
        %v966 = vmul.f32 %v894, 1.442695
        %v967 = vpow.pop %v966
        %v968 = vmul.f32 %v898, 1.442695
        %v969 = vpow.pop %v968
        %v970 = vmul.f32 %v900, 1.442695
        %v971 = vpow.pop %v970
        %v972 = vmul.f32 %v902, 1.442695
        %v973 = vpow.pop %v972
        %v974 = vmul.f32 %v904, 1.442695
        %v975 = vpow.pop %v974
        %v976 = vmul.f32 %v908, 1.442695
        %v977 = vpow.pop %v976
        %v978 = vmul.f32 %v910, 1.442695
        %v979 = vpow.pop %v978
        %v980 = vmul.f32 %v912, 1.442695
        %v981 = vpow.pop %v980
        %v982 = vmul.f32 %v914, 1.442695
        %v983 = vpow.pop %v982
        %v984 = vmul.f32 %v918, 1.442695
        %v985 = vpow.pop %v984
        %v986 = vmul.f32 %v920, 1.442695
        %v987 = vpow.pop %v986
        %v988 = vmul.f32 %v922, 1.442695
        %v989 = vpow.pop %v988
        %v990 = vmul.f32 %v924, 1.442695
        %v991 = vpow.pop %v990
        %v992 = vmul.f32 %v928, 1.442695
        %v993 = vpow.pop %v992
        %v994 = vmul.f32 %v930, 1.442695
        %v995 = vpow.pop %v994
        %v996 = vmul.f32 %v932, 1.442695
        %v997 = vpow.pop %v996
        %v998 = vmul.f32 %v934, 1.442695
        %v999 = vpow.pop %v998
        %1000 = vst [vmem:[%s261] sm:$0xff] %v937
        %1001 = vst [vmem:[%s261 + $0x8] sm:$0xff] %v939
        %1002 = vst [vmem:[%s261 + $0x10] sm:$0xff] %v941
        %1003 = vst [vmem:[%s261 + $0x18] sm:$0xff] %v943
        %1004 = vst [vmem:[%s261 + $0x20] sm:$0xff] %v945
        %1005 = vst [vmem:[%s261 + $0x28] sm:$0xff] %v947
        %1006 = vst [vmem:[%s261 + $0x30] sm:$0xff] %v949
        %1007 = vst [vmem:[%s261 + $0x38] sm:$0xff] %v951
        %1008 = vst [vmem:[%s261 + $0x40] sm:$0xff] %v953
        %1009 = vst [vmem:[%s261 + $0x48] sm:$0xff] %v955
        %1010 = vst [vmem:[%s261 + $0x50] sm:$0xff] %v957
        %1011 = vst [vmem:[%s261 + $0x58] sm:$0xff] %v959
        %1012 = vst [vmem:[%s261 + $0x60] sm:$0xff] %v961
        %1013 = vst [vmem:[%s261 + $0x68] sm:$0xff] %v963
        %1014 = vst [vmem:[%s261 + $0x70] sm:$0xff] %v965
        %1015 = vst [vmem:[%s261 + $0x78] sm:$0xff] %v967
        %1016 = vst [vmem:[%s261 + $0x80] sm:$0xff] %v969
        %1017 = vst [vmem:[%s261 + $0x88] sm:$0xff] %v971
        %1018 = vst [vmem:[%s261 + $0x90] sm:$0xff] %v973
        %1019 = vst [vmem:[%s261 + $0x98] sm:$0xff] %v975
        %1020 = vst [vmem:[%s261 + $0xa0] sm:$0xff] %v977
        %1021 = vst [vmem:[%s261 + $0xa8] sm:$0xff] %v979
        %1022 = vst [vmem:[%s261 + $0xb0] sm:$0xff] %v981
        %1023 = vst [vmem:[%s261 + $0xb8] sm:$0xff] %v983
        %1024 = vst [vmem:[%s261 + $0xc0] sm:$0xff] %v985
        %1025 = vst [vmem:[%s261 + $0xc8] sm:$0xff] %v987
        %1026 = vst [vmem:[%s261 + $0xd0] sm:$0xff] %v989
        %1027 = vst [vmem:[%s261 + $0xd8] sm:$0xff] %v991
        %1028 = vst [vmem:[%s261 + $0xe0] sm:$0xff] %v993
        %1029 = vst [vmem:[%s261 + $0xe8] sm:$0xff] %v995
        %1030 = vst [vmem:[%s261 + $0xf0] sm:$0xff] %v997
        %1031 = vst [vmem:[%s261 + $0xf8] sm:$0xff] %v999
        %s1032 = sand.u32 %s164, 1
        %s1033 = scalar_lea.sflag [#allocation3], %s1032
        %s1034 = sand.u32 %s164, 1
        %s1035 = smul.addr %s1034, 256
        %s1036 = scalar_lea.vmem [#allocation2], %s1035
        // Predicated region
        $region45: #{tpu_custom_call.1} parent=43 // pred_check
          %p1037 = pneg %p174
        $region46: #{tpu_custom_call.1} parent=43 // pred_check_branch
          %1039 = sbr.rel (%p1037) target = $region48
        $region47: #{tpu_custom_call.1} parent=43 // pred_region
          %s1040 = smul.u32 16, %s20
          %s1042 = ssub.s32 4096, 4096
          %1043 = vsyncadd %s1033, %s1042
          %s1044 = smul.addr %s1040, 2
          %s1045 = smul.addr %s1044, 128
          %s1046 = scalar_lea.hbm %s6, %s1045
          %s1047 = sshll.u32 %s1036, 4
          %s1048 = int_to_ptr.vmem [resolvable:$true] %s1047
          %1053 = dma.vmem_to_hbm [thread:$0]  %s1048, 4096, %s1046, %s1033, 256, 256, 16
        $region48: #{tpu_custom_call.1} parent=43 // pred_fallthru
          _
      $region44: #{tpu_custom_call.1} parent=5 // pred_fallthru
        _
      %p1054 = scmp.le.s32.totalorder 2, %s15
      // Predicated region
      $region49: #{tpu_custom_call.1} parent=5 // pred_check
        %p1055 = pneg %p1054
      $region50: #{tpu_custom_call.1} parent=5 // pred_check_branch
        %1057 = sbr.rel (%p1055) target = $region52
      $region51: #{tpu_custom_call.1} parent=5 // pred_region
        %s1058 = ssub.s32 %s15, 2
        // Predicated region
        $region53: #{tpu_custom_call.1} parent=51 // pred_check
          %p1059 = pneg %p180
        $region54: #{tpu_custom_call.1} parent=51 // pred_check_branch
          %1061 = sbr.rel (%p1059) target = $region56
        $region55: #{tpu_custom_call.1} parent=51 // pred_region
          %s1062 = sand.u32 %s165, 1
          %s1063 = scalar_lea.sflag [#allocation3], %s1062
          %s1064 = sand.u32 %s165, 1
          %s1065 = smul.addr %s1064, 256
          %s1066 = scalar_lea.vmem [#allocation2], %s1065
          %1067 = dma.done %s1063, 4096
        $region56: #{tpu_custom_call.1} parent=51 // pred_fallthru
          _
      $region52: #{tpu_custom_call.1} parent=5 // pred_fallthru
        _
    $region6: #{tpu_custom_call.1} parent=1 // loop_footer
      %s19 = sadd.s32 1, %s15
    $region7: #{tpu_custom_call.1} parent=1 // loop_footer_branch
      %14 = sbr.rel target = $region3
    $region8: #{tpu_custom_call.1} parent=1 // loop_exit
      _
    %1068 = vsyncpa [#allocation3], 1
    %s1069 = scalar_lea.sflag [#allocation3], 1
    %1070 = vsyncpa %s1069, 1

</llo_original>
